<compile_context>
chip_gen: v5e
topology: v5e:2x2
jax: 0.10.0
libtpu: 0.0.40
codegen_flags: <defaults>
</compile_context>

<pallas_src>
import functools

import jax
import jax.numpy as jnp
from jax.experimental import pallas as pl
from jax.experimental.pallas import tpu as pltpu

BN_EPS = 1e-5  # torch BatchNorm1d default eps (eval mode, running stats)


# ----------------------------------------------------------------------------
# Host-side eval-BN folding (valid only for inference with running stats)
# ----------------------------------------------------------------------------
def _bn_scale_shift(g, b, m, v):
    s = g * jax.lax.rsqrt(v + BN_EPS)
    return s, b - m * s


def fold_params(p):
    """Fold eval-mode BatchNorms into the adjacent Linear weights/biases."""
    # OutMLP: BN1 -> Linear(2H,128) -> ReLU -> BN2 -> Linear(128,1)
    s1, t1 = _bn_scale_shift(p["bn1_g"], p["bn1_b"], p["bn1_m"], p["bn1_v"])
    w1f = p["w1"] * s1.reshape(-1, 1)                 # [2H,128] row-scaled
    b1f = t1 @ p["w1"] + p["b1"]                      # [1,128]
    s2, t2 = _bn_scale_shift(p["bn2_g"], p["bn2_b"], p["bn2_m"], p["bn2_v"])
    w2f = p["w2"] * s2.reshape(-1, 1)                 # [128,1] row-scaled
    b2f = t2 @ p["w2"] + p["b2"]                      # [1,1]

    # ProtAttn: Linear(H,H) -> BN(H) -> ReLU -> Linear(H,H) -> Sigmoid
    sa, ta = _bn_scale_shift(p["pa_bn_g"], p["pa_bn_b"], p["pa_bn_m"], p["pa_bn_v"])
    wa1f = p["pa_w1"] * sa                            # [H,H] column-scaled
    ba1f = p["pa_b1"] * sa + ta                       # [1,H]

    return {
        "w1": w1f,                                            # [2H,128]
        "mlp_vecs": jnp.concatenate([b1f, w2f.T], axis=0),    # [2,128] rows: b1', w2'^T
        "b2": b2f,                                            # [1,1] (SMEM scalar)
        "pa_w1": wa1f,                                        # [H,H]
        "pa_w2": p["pa_w2"],                                  # [H,H]
        "pa_vecs": jnp.concatenate([ba1f, p["pa_b2"]], 0),    # [2,H] rows: ba1', ba2
    }


# ----------------------------------------------------------------------------
# Fused kernel.  Grid = (B, L // TL); l axis is an accumulation ("arbitrary").
#   per (b,l):  ProtAttn on prot tile (written out), accumulate prot sum;
#   at l == last: drug mean readout, concat, folded OutMLP, lane-dense pred.
# ----------------------------------------------------------------------------
def _fused_kernel(node_ref, prot_ref, w1_ref, mlp_vec_ref, wa1_ref, wa2_ref,
                  pa_vec_ref, b2_ref, pred_ref, attn_ref, prot_sum_ref,
                  *, l_total):
    li = pl.program_id(1)

    @pl.when(li == 0)
    def _():
        prot_sum_ref[...] = jnp.zeros_like(prot_sum_ref)

    prot_blk = prot_ref[0]                                   # [TL, H]

    # ---- ProtAttn on this tile (BN already folded into wa1 / ba1) ----------
    z = jnp.dot(prot_blk, wa1_ref[...], preferred_element_type=jnp.float32)
    z = jnp.maximum(z + pa_vec_ref[0:1, :], 0.0)
    z = jnp.dot(z, wa2_ref[...], preferred_element_type=jnp.float32)
    attn_ref[0] = jax.nn.sigmoid(z + pa_vec_ref[1:2, :])

    # ---- accumulate protein features for the mean pooling ------------------
    prot_sum_ref[...] += jnp.sum(prot_blk, axis=0, keepdims=True)

    # ---- finalize: readout + OutMLP (BN folded) on the last L tile ---------
    @pl.when(li == pl.num_programs(1) - 1)
    def _():
        node = node_ref[0]                                   # [N, H]
        drug_h = jnp.mean(node, axis=0, keepdims=True)       # mean readout [1,H]
        prot_h = prot_sum_ref[...] * (1.0 / l_total)         # [1,H]
        h = jnp.concatenate([drug_h, prot_h], axis=-1)       # concat -> [1,2H]

        x = jnp.dot(h, w1_ref[...], preferred_element_type=jnp.float32)
        x = jnp.maximum(x + mlp_vec_ref[0:1, :], 0.0)        # [1,128]
        # final Linear(128,1): VPU multiply + lane reduction (no N=1 MXU op)
        pred = jnp.sum(x * mlp_vec_ref[1:2, :], axis=-1, keepdims=True)
        pred = pred + b2_ref[0, 0]                           # [1,1]
        # lane-dense write; wrapper slices column 0
        pred_ref[...] = jnp.broadcast_to(pred, pred_ref.shape)


def _pick_tl(L, cap=512):
    for t in range(min(L, cap), 0, -1):
        if L % t == 0 and t % 8 == 0:
            return t
    return L


def mymodel_fused_forward(node_feat, prot_feat, fp, *, tl=None):
    """Returns (pred [B,1], prot_attn [B,L,H]) from one fused pallas_call."""
    B, N, H = node_feat.shape
    _, L, _ = prot_feat.shape
    if tl is None:
        tl = _pick_tl(L)
    assert L % tl == 0, "protein length must be divisible by the L tile"
    n_l = L // tl
    f_in = 2 * H

    kernel = functools.partial(_fused_kernel, l_total=L)

    grid_spec = pltpu.PrefetchScalarGridSpec(
        num_scalar_prefetch=0,
        grid=(B, n_l),
        in_specs=[
            pl.BlockSpec((1, N, H), lambda b, l: (b, 0, 0)),   # node_feat
            pl.BlockSpec((1, tl, H), lambda b, l: (b, l, 0)),  # prot_feat tile
            pl.BlockSpec((f_in, 128), lambda b, l: (0, 0)),    # folded W1
            pl.BlockSpec((2, 128), lambda b, l: (0, 0)),       # packed b1'/w2' row
            pl.BlockSpec((H, H), lambda b, l: (0, 0)),         # folded Wa1
            pl.BlockSpec((H, H), lambda b, l: (0, 0)),         # Wa2
            pl.BlockSpec((2, H), lambda b, l: (0, 0)),         # packed ba1'/ba2
            pl.BlockSpec(memory_space=pltpu.MemorySpace.SMEM), # scalar b2'
        ],
        out_specs=[
            pl.BlockSpec((1, 1, 128), lambda b, l: (b, 0, 0)), # lane-dense pred slab
            pl.BlockSpec((1, tl, H), lambda b, l: (b, l, 0)),  # ProtAttn output
        ],
        scratch_shapes=[pltpu.VMEM((1, H), jnp.float32)],      # prot-sum accumulator
    )

    pred_pad, prot_attn = pl.pallas_call(
        kernel,
        out_shape=(
            jax.ShapeDtypeStruct((B, 1, 128), jnp.float32),
            jax.ShapeDtypeStruct((B, L, H), jnp.float32),
        ),
        grid_spec=grid_spec,
        compiler_params=pltpu.CompilerParams(
            dimension_semantics=("parallel", "arbitrary"),
            # tiles sized well under 32 MiB scoped VMEM -> also fits v7x (64 MiB phys)
            vmem_limit_bytes=32 * 1024 * 1024,
        ),
    )(node_feat, prot_feat, fp["w1"], fp["mlp_vecs"],
      fp["pa_w1"], fp["pa_w2"], fp["pa_vecs"], fp["b2"])

    return pred_pad[:, 0, :1], prot_attn


# ----------------------------------------------------------------------------
# Pure-JAX references (unfolded BN, for correctness check)
# ----------------------------------------------------------------------------
def _bn_eval(x, gamma, beta, mean, var):
    return (x - mean) * jax.lax.rsqrt(var + BN_EPS) * gamma + beta


def mymodel_forward_ref(node_feat, prot_feat, p):
    drug_h = jnp.mean(node_feat, axis=1)
    prot_h = jnp.mean(prot_feat, axis=1)
    h = jnp.concatenate([drug_h, prot_h], axis=-1)
    x = _bn_eval(h, p["bn1_g"], p["bn1_b"], p["bn1_m"], p["bn1_v"])
    x = jnp.maximum(x @ p["w1"] + p["b1"], 0.0)
    x = _bn_eval(x, p["bn2_g"], p["bn2_b"], p["bn2_m"], p["bn2_v"])
    return x @ p["w2"] + p["b2"]


def prot_attn_forward_ref(prot_feat, p):
    z = jnp.einsum("blh,hk->blk", prot_feat, p["pa_w1"]) + p["pa_b1"]
    z = _bn_eval(z, p["pa_bn_g"], p["pa_bn_b"], p["pa_bn_m"], p["pa_bn_v"])
    z = jnp.maximum(z, 0.0)
    z = jnp.einsum("blh,hk->blk", z, p["pa_w2"]) + p["pa_b2"]
    return jax.nn.sigmoid(z)


# ----------------------------------------------------------------------------
# Deterministic parameter init (weights stored as [in, out]; torch stores
# [out, in] and applies x @ W.T — equivalent parameterization)
# ----------------------------------------------------------------------------
def init_params(key, hidden):
    f_in = 2 * hidden      # OutMLP in_feats = hidden_size * 2
    f_mid = 128
    ks = iter(jax.random.split(key, 32))

    def u(k, shape, scale=0.1):
        return jax.random.uniform(k, shape, jnp.float32, -scale, scale)

    return {
        # OutMLP
        "bn1_g": 1.0 + u(next(ks), (1, f_in)),
        "bn1_b": u(next(ks), (1, f_in)),
        "bn1_m": u(next(ks), (1, f_in)),
        "bn1_v": jax.random.uniform(next(ks), (1, f_in), jnp.float32, 0.5, 1.5),
        "w1": u(next(ks), (f_in, f_mid)),
        "b1": u(next(ks), (1, f_mid)),
        "bn2_g": 1.0 + u(next(ks), (1, f_mid)),
        "bn2_b": u(next(ks), (1, f_mid)),
        "bn2_m": u(next(ks), (1, f_mid)),
        "bn2_v": jax.random.uniform(next(ks), (1, f_mid), jnp.float32, 0.5, 1.5),
        "w2": u(next(ks), (f_mid, 1)),
        "b2": u(next(ks), (1, 1)),
        # ProtAttn
        "pa_w1": u(next(ks), (hidden, hidden)),
        "pa_b1": u(next(ks), (1, hidden)),
        "pa_bn_g": 1.0 + u(next(ks), (1, hidden)),
        "pa_bn_b": u(next(ks), (1, hidden)),
        "pa_bn_m": u(next(ks), (1, hidden)),
        "pa_bn_v": jax.random.uniform(next(ks), (1, hidden), jnp.float32, 0.5, 1.5),
        "pa_w2": u(next(ks), (hidden, hidden)),
        "pa_b2": u(next(ks), (1, hidden)),
    }


if __name__ == "__main__":
    # batch, nodes/graph, protein length, hidden_size
    B, N, L, H = 2, 8, 128, 32

    key = jax.random.PRNGKey(0)
    k_node, k_prot, k_par = jax.random.split(key, 3)
    node_feat = jax.random.normal(k_node, (B, N, H), jnp.float32)  # GNN output (stand-in)
    prot_feat = jax.random.normal(k_prot, (B, L, H), jnp.float32)  # ProTrans output (stand-in)
    params = init_params(k_par, H)

    folded = fold_params(params)   # host-side, once per set of weights

    # tl=64 -> 2 L-tiles per batch element, exercises the accumulator path
    pred, prot_att = mymodel_fused_forward(node_feat, prot_feat, folded, tl=64)
    pred = jax.block_until_ready(pred)
    prot_att = jax.block_until_ready(prot_att)

    pred_ref = mymodel_forward_ref(node_feat, prot_feat, params)
    prot_att_ref = prot_attn_forward_ref(prot_feat, params)

    assert pred.shape == (B, 1)
    assert prot_att.shape == (B, L, H)
    assert jnp.allclose(pred, pred_ref, atol=1e-4, rtol=1e-4)
    assert jnp.allclose(prot_att, prot_att_ref, atol=1e-4, rtol=1e-4)

    print("KERNEL_OK")
</pallas_src>

<mosaic_0001>
module attributes {stable_mosaic.version = 11 : i64} {
  func.func @_fused_kernel(%arg0: i32, %arg1: i32, %arg2: memref<1x8x32xf32, #tpu.memory_space<vmem>>, %arg3: memref<1x64x32xf32, #tpu.memory_space<vmem>>, %arg4: memref<64x128xf32, #tpu.memory_space<vmem>>, %arg5: memref<2x128xf32, #tpu.memory_space<vmem>>, %arg6: memref<32x32xf32, #tpu.memory_space<vmem>>, %arg7: memref<32x32xf32, #tpu.memory_space<vmem>>, %arg8: memref<2x32xf32, #tpu.memory_space<vmem>>, %arg9: memref<1x1xf32, #tpu.memory_space<smem>>, %arg10: memref<1x1x128xf32, #tpu.memory_space<vmem>>, %arg11: memref<1x64x32xf32, #tpu.memory_space<vmem>>, %arg12: memref<1x32xf32, #tpu.memory_space<vmem>>) attributes {dimension_semantics = [#tpu.dimension_semantics<parallel>, #tpu.dimension_semantics<arbitrary>], iteration_bounds = array<i64: 2, 2>, scalar_prefetch = 0 : i64, scratch_operands = 1 : i64, tpu.core_type = #tpu.core_type<tc>, window_params = [{transform_indices = @transform_0, window_bounds = array<i64: 1, 8, 32>}, {transform_indices = @transform_1, window_bounds = array<i64: 1, 64, 32>}, {pipeline_mode = #tpu.pipeline_mode<synchronous>, transform_indices = @transform_2, window_bounds = array<i64: 64, 128>}, {pipeline_mode = #tpu.pipeline_mode<synchronous>, transform_indices = @transform_3, window_bounds = array<i64: 2, 128>}, {pipeline_mode = #tpu.pipeline_mode<synchronous>, transform_indices = @transform_4, window_bounds = array<i64: 32, 32>}, {pipeline_mode = #tpu.pipeline_mode<synchronous>, transform_indices = @transform_5, window_bounds = array<i64: 32, 32>}, {pipeline_mode = #tpu.pipeline_mode<synchronous>, transform_indices = @transform_6, window_bounds = array<i64: 2, 32>}, {transform_indices = @transform_7, window_bounds = array<i64: 1, 1>}, {transform_indices = @transform_8, window_bounds = array<i64: 1, 1, 128>}, {transform_indices = @transform_9, window_bounds = array<i64: 1, 64, 32>}]} {
    %c0_i32 = arith.constant 0 : i32
    %0 = arith.cmpi eq, %arg1, %c0_i32 : i32
    %1 = arith.extui %0 : i1 to i32
    %c0_i32_0 = arith.constant 0 : i32
    %2 = arith.cmpi ne, %1, %c0_i32_0 : i32
    scf.if %2 {
      %cst_22 = arith.constant 0.000000e+00 : f32
      %33 = vector.broadcast %cst_22 : f32 to vector<1x32xf32>
      %c0_23 = arith.constant 0 : index
      %c0_24 = arith.constant 0 : index
      %34 = vector.load %arg12[%c0_23, %c0_24] : memref<1x32xf32, #tpu.memory_space<vmem>>, vector<1x32xf32>
      tpu.vector_store %arg12[%c0_23, %c0_24], %33 {strides = array<i32>} : memref<1x32xf32, #tpu.memory_space<vmem>>, vector<1x32xf32>,
    } else {
    }
    %c0 = arith.constant 0 : index
    %c0_1 = arith.constant 0 : index
    %c0_2 = arith.constant 0 : index
    %3 = vector.load %arg3[%c0, %c0_1, %c0_2] : memref<1x64x32xf32, #tpu.memory_space<vmem>>, vector<1x64x32xf32>
    %4 = vector.shape_cast %3 : vector<1x64x32xf32> to vector<64x32xf32>
    %c0_3 = arith.constant 0 : index
    %c0_4 = arith.constant 0 : index
    %5 = vector.load %arg6[%c0_3, %c0_4] : memref<32x32xf32, #tpu.memory_space<vmem>>, vector<32x32xf32>
    %cst = arith.constant dense<0.000000e+00> : vector<64x32xf32>
    %6 = tpu.matmul %4, %5, %cst {dimension_numbers = #tpu.dot_dimension_numbers<[1], [0], [0], [1], [0, 0, 1, 1], [], []>} : vector<64x32xf32>, vector<32x32xf32>, vector<64x32xf32> -> vector<64x32xf32>
    %c0_5 = arith.constant 0 : index
    %c0_6 = arith.constant 0 : index
    %7 = vector.load %arg8[%c0_5, %c0_6] : memref<2x32xf32, #tpu.memory_space<vmem>>, vector<1x32xf32>
    %8 = vector.broadcast %7 : vector<1x32xf32> to vector<64x32xf32>
    %9 = arith.addf %6, %8 : vector<64x32xf32>
    %cst_7 = arith.constant 0.000000e+00 : f32
    %10 = vector.broadcast %cst_7 : f32 to vector<64x32xf32>
    %11 = arith.maximumf %9, %10 : vector<64x32xf32>
    %c0_8 = arith.constant 0 : index
    %c0_9 = arith.constant 0 : index
    %12 = vector.load %arg7[%c0_8, %c0_9] : memref<32x32xf32, #tpu.memory_space<vmem>>, vector<32x32xf32>
    %cst_10 = arith.constant dense<0.000000e+00> : vector<64x32xf32>
    %13 = tpu.matmul %11, %12, %cst_10 {dimension_numbers = #tpu.dot_dimension_numbers<[1], [0], [0], [1], [0, 0, 1, 1], [], []>} : vector<64x32xf32>, vector<32x32xf32>, vector<64x32xf32> -> vector<64x32xf32>
    %c1 = arith.constant 1 : index
    %c0_11 = arith.constant 0 : index
    %14 = vector.load %arg8[%c1, %c0_11] : memref<2x32xf32, #tpu.memory_space<vmem>>, vector<1x32xf32>
    %15 = vector.broadcast %14 : vector<1x32xf32> to vector<64x32xf32>
    %16 = arith.addf %13, %15 : vector<64x32xf32>
    %17 = arith.negf %16 : vector<64x32xf32>
    %18 = math.exp %17 : vector<64x32xf32>
    %cst_12 = arith.constant 1.000000e+00 : f32
    %19 = vector.broadcast %cst_12 : f32 to vector<64x32xf32>
    %20 = arith.addf %19, %18 : vector<64x32xf32>
    %21 = arith.divf %19, %20 : vector<64x32xf32>
    %c0_13 = arith.constant 0 : index
    %c0_14 = arith.constant 0 : index
    %c0_15 = arith.constant 0 : index
    %22 = vector.load %arg11[%c0_13, %c0_14, %c0_15] : memref<1x64x32xf32, #tpu.memory_space<vmem>>, vector<1x64x32xf32>
    %23 = vector.shape_cast %22 : vector<1x64x32xf32> to vector<64x32xf32>
    %24 = vector.shape_cast %21 : vector<64x32xf32> to vector<1x64x32xf32>
    tpu.vector_store %arg11[%c0_13, %c0_14, %c0_15], %24 {strides = array<i32>} : memref<1x64x32xf32, #tpu.memory_space<vmem>>, vector<1x64x32xf32>,
    %c0_16 = arith.constant 0 : index
    %c0_17 = arith.constant 0 : index
    %25 = vector.load %arg12[%c0_16, %c0_17] : memref<1x32xf32, #tpu.memory_space<vmem>>, vector<1x32xf32>
    %cst_18 = arith.constant dense<0.000000e+00> : vector<32xf32>
    %26 = vector.multi_reduction <add>, %4, %cst_18 [0] : vector<64x32xf32> to vector<32xf32>
    %27 = vector.shape_cast %26 : vector<32xf32> to vector<1x32xf32>
    %28 = arith.addf %25, %27 : vector<1x32xf32>
    %c0_19 = arith.constant 0 : index
    %c0_20 = arith.constant 0 : index
    %29 = vector.load %arg12[%c0_19, %c0_20] : memref<1x32xf32, #tpu.memory_space<vmem>>, vector<1x32xf32>
    tpu.vector_store %arg12[%c0_19, %c0_20], %28 {strides = array<i32>} : memref<1x32xf32, #tpu.memory_space<vmem>>, vector<1x32xf32>,
    %c1_i32 = arith.constant 1 : i32
    %30 = arith.cmpi eq, %arg1, %c1_i32 : i32
    %31 = arith.extui %30 : i1 to i32
    %c0_i32_21 = arith.constant 0 : i32
    %32 = arith.cmpi ne, %31, %c0_i32_21 : i32
    scf.if %32 {
      %c0_22 = arith.constant 0 : index
      %c0_23 = arith.constant 0 : index
      %c0_24 = arith.constant 0 : index
      %33 = vector.load %arg2[%c0_22, %c0_23, %c0_24] : memref<1x8x32xf32, #tpu.memory_space<vmem>>, vector<1x8x32xf32>
      %34 = vector.shape_cast %33 : vector<1x8x32xf32> to vector<8x32xf32>
      %cst_25 = arith.constant dense<0.000000e+00> : vector<32xf32>
      %35 = vector.multi_reduction <add>, %34, %cst_25 [0] : vector<8x32xf32> to vector<32xf32>
      %36 = vector.shape_cast %35 : vector<32xf32> to vector<1x32xf32>
      %cst_26 = arith.constant 8.000000e+00 : f32
      %37 = vector.broadcast %cst_26 : f32 to vector<1x32xf32>
      %38 = arith.divf %36, %37 : vector<1x32xf32>
      %c0_27 = arith.constant 0 : index
      %c0_28 = arith.constant 0 : index
      %39 = vector.load %arg12[%c0_27, %c0_28] : memref<1x32xf32, #tpu.memory_space<vmem>>, vector<1x32xf32>
      %cst_29 = arith.constant 7.812500e-03 : f32
      %40 = vector.broadcast %cst_29 : f32 to vector<1x32xf32>
      %41 = arith.mulf %39, %40 : vector<1x32xf32>
      %42 = tpu.concatenate %38, %41 in 1 : vector<1x32xf32>, vector<1x32xf32> -> vector<1x64xf32>
      %c0_30 = arith.constant 0 : index
      %c0_31 = arith.constant 0 : index
      %43 = vector.load %arg4[%c0_30, %c0_31] : memref<64x128xf32, #tpu.memory_space<vmem>>, vector<64x128xf32>
      %cst_32 = arith.constant dense<0.000000e+00> : vector<1x128xf32>
      %44 = tpu.matmul %42, %43, %cst_32 {dimension_numbers = #tpu.dot_dimension_numbers<[1], [0], [0], [1], [0, 0, 1, 1], [], []>} : vector<1x64xf32>, vector<64x128xf32>, vector<1x128xf32> -> vector<1x128xf32>
      %c0_33 = arith.constant 0 : index
      %c0_34 = arith.constant 0 : index
      %45 = vector.load %arg5[%c0_33, %c0_34] : memref<2x128xf32, #tpu.memory_space<vmem>>, vector<1x128xf32>
      %46 = arith.addf %44, %45 : vector<1x128xf32>
      %cst_35 = arith.constant 0.000000e+00 : f32
      %47 = vector.broadcast %cst_35 : f32 to vector<1x128xf32>
      %48 = arith.maximumf %46, %47 : vector<1x128xf32>
      %c1_36 = arith.constant 1 : index
      %c0_37 = arith.constant 0 : index
      %49 = vector.load %arg5[%c1_36, %c0_37] : memref<2x128xf32, #tpu.memory_space<vmem>>, vector<1x128xf32>
      %50 = arith.mulf %48, %49 : vector<1x128xf32>
      %cst_38 = arith.constant dense<0.000000e+00> : vector<1xf32>
      %51 = vector.multi_reduction <add>, %50, %cst_38 [1] : vector<1x128xf32> to vector<1xf32>
      %52 = vector.shape_cast %51 : vector<1xf32> to vector<1x1xf32>
      %c0_39 = arith.constant 0 : index
      %c0_40 = arith.constant 0 : index
      %53 = memref.load %arg9[%c0_39, %c0_40] : memref<1x1xf32, #tpu.memory_space<smem>>
      %54 = vector.broadcast %53 : f32 to vector<1x1xf32>
      %55 = arith.addf %52, %54 : vector<1x1xf32>
      %56 = vector.shape_cast %55 : vector<1x1xf32> to vector<1x1x1xf32>
      %57 = vector.broadcast %56 : vector<1x1x1xf32> to vector<1x1x128xf32>
      %c0_41 = arith.constant 0 : index
      %c0_42 = arith.constant 0 : index
      %c0_43 = arith.constant 0 : index
      %58 = vector.load %arg10[%c0_41, %c0_42, %c0_43] : memref<1x1x128xf32, #tpu.memory_space<vmem>>, vector<1x1x128xf32>
      tpu.vector_store %arg10[%c0_41, %c0_42, %c0_43], %57 {strides = array<i32>} : memref<1x1x128xf32, #tpu.memory_space<vmem>>, vector<1x1x128xf32>,
    } else {
    }
    return
  }
  func.func @transform_0(%arg0: i32, %arg1: i32) -> (i32, i32, i32) {
    %c0_i32 = arith.constant 0 : i32
    %c0_i32_0 = arith.constant 0 : i32
    %c0_i32_1 = arith.constant 0 : i32
    return %arg0, %c0_i32, %c0_i32_0 : i32, i32, i32
  }
  func.func @transform_1(%arg0: i32, %arg1: i32) -> (i32, i32, i32) {
    %c0_i32 = arith.constant 0 : i32
    %c0_i32_0 = arith.constant 0 : i32
    return %arg0, %arg1, %c0_i32 : i32, i32, i32
  }
  func.func @transform_2(%arg0: i32, %arg1: i32) -> (i32, i32) {
    %c0_i32 = arith.constant 0 : i32
    %c0_i32_0 = arith.constant 0 : i32
    %c0_i32_1 = arith.constant 0 : i32
    return %c0_i32, %c0_i32_0 : i32, i32
  }
  func.func @transform_3(%arg0: i32, %arg1: i32) -> (i32, i32) {
    %c0_i32 = arith.constant 0 : i32
    %c0_i32_0 = arith.constant 0 : i32
    %c0_i32_1 = arith.constant 0 : i32
    return %c0_i32, %c0_i32_0 : i32, i32
  }
  func.func @transform_4(%arg0: i32, %arg1: i32) -> (i32, i32) {
    %c0_i32 = arith.constant 0 : i32
    %c0_i32_0 = arith.constant 0 : i32
    %c0_i32_1 = arith.constant 0 : i32
    return %c0_i32, %c0_i32_0 : i32, i32
  }
  func.func @transform_5(%arg0: i32, %arg1: i32) -> (i32, i32) {
    %c0_i32 = arith.constant 0 : i32
    %c0_i32_0 = arith.constant 0 : i32
    %c0_i32_1 = arith.constant 0 : i32
    return %c0_i32, %c0_i32_0 : i32, i32
  }
  func.func @transform_6(%arg0: i32, %arg1: i32) -> (i32, i32) {
    %c0_i32 = arith.constant 0 : i32
    %c0_i32_0 = arith.constant 0 : i32
    %c0_i32_1 = arith.constant 0 : i32
    return %c0_i32, %c0_i32_0 : i32, i32
  }
  func.func @transform_7(%arg0: i32, %arg1: i32) -> (i32, i32) {
    %c0_i32 = arith.constant 0 : i32
    %c0_i32_0 = arith.constant 0 : i32
    %c0_i32_1 = arith.constant 0 : i32
    return %c0_i32, %c0_i32_0 : i32, i32
  }
  func.func @transform_8(%arg0: i32, %arg1: i32) -> (i32, i32, i32) {
    %c0_i32 = arith.constant 0 : i32
    %c0_i32_0 = arith.constant 0 : i32
    %c0_i32_1 = arith.constant 0 : i32
    return %arg0, %c0_i32, %c0_i32_0 : i32, i32, i32
  }
  func.func @transform_9(%arg0: i32, %arg1: i32) -> (i32, i32, i32) {
    %c0_i32 = arith.constant 0 : i32
    %c0_i32_0 = arith.constant 0 : i32
    return %arg0, %arg1, %c0_i32 : i32, i32, i32
  }
}

</mosaic_0001>

<llo_original>
// kernel: tpu_custom_call.1
$region0: #{tpu_custom_call.1}
  #allocation0 [shape = 'u32[]', space=smem, size = 0x4, offset = 0x4, fixed_abs, tag = 'smem constant byte address 0x4 - core index']
  #allocation1 [shape = 'u32[72,128]{1,0:T(1,128)}', space=vmem, size = 0x9000, scoped, tag = 'internal scratch']
  #allocation2 [shape = 'f32[1,32]{1,0:T(1,128)}', space=vmem, size = 0x200, scoped, tag = 'scratch operand']
  #allocation3 [shape = 'f32[1,1]{1,0:T(1,128)S(6)}', space=smem, size = 0x200, scoped, tag = 'scoped memory for tpu_custom_call.1']
  %s0 = inlined_call_operand.vmem [shape: f32[2,8,32], index: 0, kind: input, shape index: {}]
  %s1 = inlined_call_operand.vmem [shape: f32[2,128,32], index: 1, kind: input, shape index: {}]
  %s2 = inlined_call_operand.vmem [shape: f32[64,128], index: 2, kind: input, shape index: {}]
  %s3 = inlined_call_operand.vmem [shape: f32[2,128], index: 3, kind: input, shape index: {}]
  %s4 = inlined_call_operand.vmem [shape: f32[32,32], index: 4, kind: input, shape index: {}]
  %s5 = inlined_call_operand.vmem [shape: f32[32,32], index: 5, kind: input, shape index: {}]
  %s6 = inlined_call_operand.vmem [shape: f32[2,32], index: 6, kind: input, shape index: {}]
  %s7 = inlined_call_operand.<no memory space> [shape: f32[1,1], index: 7, kind: input, shape index: {}]
  %s8 = inlined_call_operand.hbm [shape: f32[2,1,128], index: 8, kind: output, shape index: {0}]
  %s9 = inlined_call_operand.vmem [shape: f32[2,128,32], index: 9, kind: output, shape index: {1}]
  %10 = xla_tuple %s8, %s9
  %s11 = sld [smem:[#allocation0]]
  $region81: #{tpu_custom_call.1} parent=0
    _
  %s13 = ssub.s32 1, %s11
  %s14 = scalar_select 0, %s13, %s11
  %15 = sst [smem:[#allocation3]] %s7
  $region1: #{tpu_custom_call.1} parent=0
    #allocation4 [shape = 'u8[1024]{0}', space=vmem, size = 0x400, scoped, tag = 'output window, operand 0']
    #allocation5 [shape = 's32[2]{0}', space=sflag, size = 0x8, scoped, tag = 'scoped memory for tpu_custom_call.1']
    %16 = vsyncpa [#allocation5], 0
    %s17 = scalar_lea.sflag [#allocation5], 1
    %18 = vsyncpa %s17, 0
    loop: start=0, step=1, limit=6
    $region2: #{tpu_custom_call.1} parent=1 // loop_pre_header
      _
    $region3: #{tpu_custom_call.1} parent=1 // loop_header
      %s20 = sphi 0, %s24
      %p21 = scmp.ge.s32.totalorder %s20, 6
      %s27 = sphi 0, %s39
      %s28 = sphi 0, %s35
      %s29 = sphi 0, %s27
      %s30 = sphi 0, %s28
      %s31 = sphi 0, %s29
      %s32 = sphi 0, %s30
      %s42 = sphi 0, %s44
      %s45 = sphi 0, %s42
      %s46 = sphi 0, %s45
      %s62 = sphi 0, %s46
      %s70 = sphi 0, %s72
      %s73 = sphi 0, %s70
      %s74 = sphi 0, %s73
      %s90 = sphi 0, %s74
      %s94 = sphi 0, %s94
      %s96 = sphi 0, %s94
      %s97 = sphi 0, %s96
      %s111 = sphi 0, %s97
      %s115 = sphi 0, %s115
      %s117 = sphi 0, %s115
      %s118 = sphi 0, %s117
      %s132 = sphi 0, %s118
      %s136 = sphi 0, %s136
      %s138 = sphi 0, %s136
      %s139 = sphi 0, %s138
      %s153 = sphi 0, %s139
      %s157 = sphi 0, %s157
      %s159 = sphi 0, %s157
      %s160 = sphi 0, %s159
      %s174 = sphi 0, %s160
      %s178 = sphi 0, %s178
      %s180 = sphi 0, %s178
      %s181 = sphi 0, %s180
      %s195 = sphi 0, %s181
      %s199 = sphi 0, %s199
      %s201 = sphi 0, %s199
      %s202 = sphi 0, %s201
      %s216 = sphi 0, %s202
      %s222 = sphi 0, %s224
      %s225 = sphi 0, %s222
      %s226 = sphi 0, %s225
      %s242 = sphi 0, %s226
      %s250 = sphi 0, %s252
      %s253 = sphi 0, %s250
      %s254 = sphi 0, %s253
      %s270 = sphi 0, %s254
    $region4: #{tpu_custom_call.1} parent=1 // loop_header_branch
      %23 = sbr.rel (%p21) target = $region8
    $region5: #{tpu_custom_call.1} parent=1 // loop_body
      %s25 = ssub.s32 %s20, 1
      %s26 = ssub.s32 %s20, 2
      %s33 = sadd.s32 1, %s28
      %p34 = scmp.ge.s32.totalorder %s33, 2
      %s35 = scalar_select %p34, 0, %s33
      %s36 = sadd.s32 1, %s27
      %s37 = scalar_select %p34, %s36, %s27
      %p38 = scmp.ge.s32.totalorder %s37, 2
      %s39 = scalar_select %p38, 0, %s37
      %s40 = ssub.s32 %s27, %s39
      %p41 = scmp.eq.s32.totalorder %s40, 0
      %s43 = sadd.s32 %s42, 1
      %s44 = scalar_select %p41, %s42, %s43
      %p47 = pneg %p41
      %p48 = scmp.eq.s32.totalorder %s20, 3
      %p49 = por %p47, %p48
      %p50 = scmp.ne.s32.totalorder %s42, %s45
      %p51 = scmp.eq.s32.totalorder %s20, 0
      %p52 = por %p50, %p51
      %p53 = scmp.ne.s32.totalorder %s42, %s45
      %p54 = scmp.eq.s32.totalorder %s25, 3
      %p55 = por %p53, %p54
      %p56 = scmp.ne.s32.totalorder %s45, %s46
      %p57 = scmp.eq.s32.totalorder %s25, 0
      %p58 = por %p56, %p57
      %p59 = scmp.ne.s32.totalorder %s45, %s46
      %p60 = scmp.eq.s32.totalorder %s26, 3
      %p61 = por %p59, %p60
      %p63 = scmp.ne.s32.totalorder %s46, %s62
      %p64 = scmp.eq.s32.totalorder %s26, 0
      %p65 = por %p63, %p64
      %s66 = ssub.s32 %s27, %s39
      %s67 = ssub.s32 %s28, %s35
      %s68 = sor.u32 %s66, %s67
      %p69 = scmp.eq.s32.totalorder %s68, 0
      %s71 = sadd.s32 %s70, 1
      %s72 = scalar_select %p69, %s70, %s71
      %p75 = pneg %p69
      %p76 = scmp.eq.s32.totalorder %s20, 3
      %p77 = por %p75, %p76
      %p78 = scmp.ne.s32.totalorder %s70, %s73
      %p79 = scmp.eq.s32.totalorder %s20, 0
      %p80 = por %p78, %p79
      %p81 = scmp.ne.s32.totalorder %s70, %s73
      %p82 = scmp.eq.s32.totalorder %s25, 3
      %p83 = por %p81, %p82
      %p84 = scmp.ne.s32.totalorder %s73, %s74
      %p85 = scmp.eq.s32.totalorder %s25, 0
      %p86 = por %p84, %p85
      %p87 = scmp.ne.s32.totalorder %s73, %s74
      %p88 = scmp.eq.s32.totalorder %s26, 3
      %p89 = por %p87, %p88
      %p91 = scmp.ne.s32.totalorder %s74, %s90
      %p92 = scmp.eq.s32.totalorder %s26, 0
      %p93 = por %p91, %p92
      %s95 = sadd.s32 %s94, 1
      %p98 = scmp.eq.s32.totalorder %s20, 3
      %p99 = scmp.ne.s32.totalorder %s94, %s96
      %p100 = scmp.eq.s32.totalorder %s20, 0
      %p101 = por %p99, %p100
      %p102 = scmp.ne.s32.totalorder %s94, %s96
      %p103 = scmp.eq.s32.totalorder %s25, 3
      %p104 = por %p102, %p103
      %p105 = scmp.ne.s32.totalorder %s96, %s97
      %p106 = scmp.eq.s32.totalorder %s25, 0
      %p107 = por %p105, %p106
      %p108 = scmp.ne.s32.totalorder %s96, %s97
      %p109 = scmp.eq.s32.totalorder %s26, 3
      %p110 = por %p108, %p109
      %p112 = scmp.ne.s32.totalorder %s97, %s111
      %p113 = scmp.eq.s32.totalorder %s26, 0
      %p114 = por %p112, %p113
      %s116 = sadd.s32 %s115, 1
      %p119 = scmp.eq.s32.totalorder %s20, 3
      %p120 = scmp.ne.s32.totalorder %s115, %s117
      %p121 = scmp.eq.s32.totalorder %s20, 0
      %p122 = por %p120, %p121
      %p123 = scmp.ne.s32.totalorder %s115, %s117
      %p124 = scmp.eq.s32.totalorder %s25, 3
      %p125 = por %p123, %p124
      %p126 = scmp.ne.s32.totalorder %s117, %s118
      %p127 = scmp.eq.s32.totalorder %s25, 0
      %p128 = por %p126, %p127
      %p129 = scmp.ne.s32.totalorder %s117, %s118
      %p130 = scmp.eq.s32.totalorder %s26, 3
      %p131 = por %p129, %p130
      %p133 = scmp.ne.s32.totalorder %s118, %s132
      %p134 = scmp.eq.s32.totalorder %s26, 0
      %p135 = por %p133, %p134
      %s137 = sadd.s32 %s136, 1
      %p140 = scmp.eq.s32.totalorder %s20, 3
      %p141 = scmp.ne.s32.totalorder %s136, %s138
      %p142 = scmp.eq.s32.totalorder %s20, 0
      %p143 = por %p141, %p142
      %p144 = scmp.ne.s32.totalorder %s136, %s138
      %p145 = scmp.eq.s32.totalorder %s25, 3
      %p146 = por %p144, %p145
      %p147 = scmp.ne.s32.totalorder %s138, %s139
      %p148 = scmp.eq.s32.totalorder %s25, 0
      %p149 = por %p147, %p148
      %p150 = scmp.ne.s32.totalorder %s138, %s139
      %p151 = scmp.eq.s32.totalorder %s26, 3
      %p152 = por %p150, %p151
      %p154 = scmp.ne.s32.totalorder %s139, %s153
      %p155 = scmp.eq.s32.totalorder %s26, 0
      %p156 = por %p154, %p155
      %s158 = sadd.s32 %s157, 1
      %p161 = scmp.eq.s32.totalorder %s20, 3
      %p162 = scmp.ne.s32.totalorder %s157, %s159
      %p163 = scmp.eq.s32.totalorder %s20, 0
      %p164 = por %p162, %p163
      %p165 = scmp.ne.s32.totalorder %s157, %s159
      %p166 = scmp.eq.s32.totalorder %s25, 3
      %p167 = por %p165, %p166
      %p168 = scmp.ne.s32.totalorder %s159, %s160
      %p169 = scmp.eq.s32.totalorder %s25, 0
      %p170 = por %p168, %p169
      %p171 = scmp.ne.s32.totalorder %s159, %s160
      %p172 = scmp.eq.s32.totalorder %s26, 3
      %p173 = por %p171, %p172
      %p175 = scmp.ne.s32.totalorder %s160, %s174
      %p176 = scmp.eq.s32.totalorder %s26, 0
      %p177 = por %p175, %p176
      %s179 = sadd.s32 %s178, 1
      %p182 = scmp.eq.s32.totalorder %s20, 3
      %p183 = scmp.ne.s32.totalorder %s178, %s180
      %p184 = scmp.eq.s32.totalorder %s20, 0
      %p185 = por %p183, %p184
      %p186 = scmp.ne.s32.totalorder %s178, %s180
      %p187 = scmp.eq.s32.totalorder %s25, 3
      %p188 = por %p186, %p187
      %p189 = scmp.ne.s32.totalorder %s180, %s181
      %p190 = scmp.eq.s32.totalorder %s25, 0
      %p191 = por %p189, %p190
      %p192 = scmp.ne.s32.totalorder %s180, %s181
      %p193 = scmp.eq.s32.totalorder %s26, 3
      %p194 = por %p192, %p193
      %p196 = scmp.ne.s32.totalorder %s181, %s195
      %p197 = scmp.eq.s32.totalorder %s26, 0
      %p198 = por %p196, %p197
      %s200 = sadd.s32 %s199, 1
      %p203 = scmp.eq.s32.totalorder %s20, 3
      %p204 = scmp.ne.s32.totalorder %s199, %s201
      %p205 = scmp.eq.s32.totalorder %s20, 0
      %p206 = por %p204, %p205
      %p207 = scmp.ne.s32.totalorder %s199, %s201
      %p208 = scmp.eq.s32.totalorder %s25, 3
      %p209 = por %p207, %p208
      %p210 = scmp.ne.s32.totalorder %s201, %s202
      %p211 = scmp.eq.s32.totalorder %s25, 0
      %p212 = por %p210, %p211
      %p213 = scmp.ne.s32.totalorder %s201, %s202
      %p214 = scmp.eq.s32.totalorder %s26, 3
      %p215 = por %p213, %p214
      %p217 = scmp.ne.s32.totalorder %s202, %s216
      %p218 = scmp.eq.s32.totalorder %s26, 0
      %p219 = por %p217, %p218
      %s220 = ssub.s32 %s27, %s39
      %p221 = scmp.eq.s32.totalorder %s220, 0
      %s223 = sadd.s32 %s222, 1
      %s224 = scalar_select %p221, %s222, %s223
      %p227 = pneg %p221
      %p228 = scmp.eq.s32.totalorder %s20, 3
      %p229 = por %p227, %p228
      %p230 = scmp.ne.s32.totalorder %s222, %s225
      %p231 = scmp.eq.s32.totalorder %s20, 0
      %p232 = por %p230, %p231
      %p233 = scmp.ne.s32.totalorder %s222, %s225
      %p234 = scmp.eq.s32.totalorder %s25, 3
      %p235 = por %p233, %p234
      %p236 = scmp.ne.s32.totalorder %s225, %s226
      %p237 = scmp.eq.s32.totalorder %s25, 0
      %p238 = por %p236, %p237
      %p239 = scmp.ne.s32.totalorder %s225, %s226
      %p240 = scmp.eq.s32.totalorder %s26, 3
      %p241 = por %p239, %p240
      %p243 = scmp.ne.s32.totalorder %s226, %s242
      %p244 = scmp.eq.s32.totalorder %s26, 0
      %p245 = por %p243, %p244
      %s246 = ssub.s32 %s27, %s39
      %s247 = ssub.s32 %s28, %s35
      %s248 = sor.u32 %s246, %s247
      %p249 = scmp.eq.s32.totalorder %s248, 0
      %s251 = sadd.s32 %s250, 1
      %s252 = scalar_select %p249, %s250, %s251
      %p255 = pneg %p249
      %p256 = scmp.eq.s32.totalorder %s20, 3
      %p257 = por %p255, %p256
      %p258 = scmp.ne.s32.totalorder %s250, %s253
      %p259 = scmp.eq.s32.totalorder %s20, 0
      %p260 = por %p258, %p259
      %p261 = scmp.ne.s32.totalorder %s250, %s253
      %p262 = scmp.eq.s32.totalorder %s25, 3
      %p263 = por %p261, %p262
      %p264 = scmp.ne.s32.totalorder %s253, %s254
      %p265 = scmp.eq.s32.totalorder %s25, 0
      %p266 = por %p264, %p265
      %p267 = scmp.ne.s32.totalorder %s253, %s254
      %p268 = scmp.eq.s32.totalorder %s26, 3
      %p269 = por %p267, %p268
      %p271 = scmp.ne.s32.totalorder %s254, %s270
      %p272 = scmp.eq.s32.totalorder %s26, 0
      %p273 = por %p271, %p272
      %p274 = scmp.le.s32.totalorder 1, %s20
      %p275 = scmp.lt.s32.totalorder %s20, 5
      %p276 = pnand %p274, %p275
      %p277 = pneg %p276
      // Predicated region
      $region9: #{tpu_custom_call.1} parent=5 // pred_check
        _
      $region10: #{tpu_custom_call.1} parent=5 // pred_check_branch
        %279 = sbr.rel (%p276) target = $region12
      $region11: #{tpu_custom_call.1} parent=5 // pred_region
        %s280 = ssub.s32 %s20, 1
        // Predicated region
        $region13: #{tpu_custom_call.1} parent=11 // pred_check
          %p281 = pneg %p107
        $region14: #{tpu_custom_call.1} parent=11 // pred_check_branch
          %283 = sbr.rel (%p281) target = $region16
        $region15: #{tpu_custom_call.1} parent=11 // pred_region
          _
        $region16: #{tpu_custom_call.1} parent=11 // pred_fallthru
          _
        // Predicated region
        $region17: #{tpu_custom_call.1} parent=11 // pred_check
          %p284 = pneg %p128
        $region18: #{tpu_custom_call.1} parent=11 // pred_check_branch
          %286 = sbr.rel (%p284) target = $region20
        $region19: #{tpu_custom_call.1} parent=11 // pred_region
          _
        $region20: #{tpu_custom_call.1} parent=11 // pred_fallthru
          _
        // Predicated region
        $region21: #{tpu_custom_call.1} parent=11 // pred_check
          %p287 = pneg %p149
        $region22: #{tpu_custom_call.1} parent=11 // pred_check_branch
          %289 = sbr.rel (%p287) target = $region24
        $region23: #{tpu_custom_call.1} parent=11 // pred_region
          _
        $region24: #{tpu_custom_call.1} parent=11 // pred_fallthru
          _
        // Predicated region
        $region25: #{tpu_custom_call.1} parent=11 // pred_check
          %p290 = pneg %p170
        $region26: #{tpu_custom_call.1} parent=11 // pred_check_branch
          %292 = sbr.rel (%p290) target = $region28
        $region27: #{tpu_custom_call.1} parent=11 // pred_region
          _
        $region28: #{tpu_custom_call.1} parent=11 // pred_fallthru
          _
        // Predicated region
        $region29: #{tpu_custom_call.1} parent=11 // pred_check
          %p293 = pneg %p191
        $region30: #{tpu_custom_call.1} parent=11 // pred_check_branch
          %295 = sbr.rel (%p293) target = $region32
        $region31: #{tpu_custom_call.1} parent=11 // pred_region
          _
        $region32: #{tpu_custom_call.1} parent=11 // pred_fallthru
          _
        // Predicated region
        $region33: #{tpu_custom_call.1} parent=11 // pred_check
          %p296 = pneg %p212
        $region34: #{tpu_custom_call.1} parent=11 // pred_check_branch
          %298 = sbr.rel (%p296) target = $region36
        $region35: #{tpu_custom_call.1} parent=11 // pred_region
          _
        $region36: #{tpu_custom_call.1} parent=11 // pred_fallthru
          _
      $region12: #{tpu_custom_call.1} parent=5 // pred_fallthru
        _
      %p299 = scmp.lt.s32.totalorder %s20, 4
      // Predicated region
      $region37: #{tpu_custom_call.1} parent=5 // pred_check
        %p300 = pneg %p299
      $region38: #{tpu_custom_call.1} parent=5 // pred_check_branch
        %302 = sbr.rel (%p300) target = $region40
      $region39: #{tpu_custom_call.1} parent=5 // pred_region
        // Predicated region
        $region41: #{tpu_custom_call.1} parent=39 // pred_check
          %p303 = pneg %p52
        $region42: #{tpu_custom_call.1} parent=39 // pred_check_branch
          %305 = sbr.rel (%p303) target = $region44
        $region43: #{tpu_custom_call.1} parent=39 // pred_region
          %p306 = scmp.lt.s32.totalorder %s27, 1
          %s307 = scalar_select %p306, %s27, 1
          %s308 = smul.addr %s307, 8
          %s309 = scalar_lea.vmem %s0, %s308
        $region44: #{tpu_custom_call.1} parent=39 // pred_fallthru
          _
        // Predicated region
        $region45: #{tpu_custom_call.1} parent=39 // pred_check
          %p310 = pneg %p80
        $region46: #{tpu_custom_call.1} parent=39 // pred_check_branch
          %312 = sbr.rel (%p310) target = $region48
        $region47: #{tpu_custom_call.1} parent=39 // pred_region
          %s313 = smul.u32 8, %s28
          %p314 = scmp.lt.s32.totalorder %s27, 1
          %s315 = scalar_select %p314, %s27, 1
          %p316 = scmp.lt.s32.totalorder %s313, 15
          %s317 = scalar_select %p316, %s313, 15
          %s318 = smul.addr %s315, 16
          %s319 = sadd.s32 %s317, %s318
          %s320 = smul.addr %s319, 8
          %s321 = scalar_lea.vmem %s1, %s320
          %s322 = smul.u32 8, %s28
        $region48: #{tpu_custom_call.1} parent=39 // pred_fallthru
          _
      $region40: #{tpu_custom_call.1} parent=5 // pred_fallthru
        _
      %p323 = scmp.le.s32.totalorder 1, %s20
      %p324 = scmp.lt.s32.totalorder %s20, 5
      %p325 = pnand %p323, %p324
      %p326 = pneg %p325
      // Predicated region
      $region49: #{tpu_custom_call.1} parent=5 // pred_check
        _
      $region50: #{tpu_custom_call.1} parent=5 // pred_check_branch
        %328 = sbr.rel (%p325) target = $region52
      $region51: #{tpu_custom_call.1} parent=5 // pred_region
        %s329 = ssub.s32 %s20, 1
        %p330 = scmp.lt.s32.totalorder %s29, 1
        %s331 = scalar_select %p330, %s29, 1
        %s332 = smul.addr %s331, 8
        %s333 = scalar_lea.vmem %s0, %s332
        %p334 = pneg %p58
        %p335 = pneg %p55
        %s336 = smul.u32 8, %s30
        %p337 = scmp.lt.s32.totalorder %s29, 1
        %s338 = scalar_select %p337, %s29, 1
        %p339 = scmp.lt.s32.totalorder %s336, 15
        %s340 = scalar_select %p339, %s336, 15
        %s341 = smul.addr %s338, 16
        %s342 = sadd.s32 %s340, %s341
        %s343 = smul.addr %s342, 8
        %s344 = scalar_lea.vmem %s1, %s343
        %p345 = pneg %p86
        %p346 = pneg %p83
        %p347 = pneg %p107
        %p348 = pneg %p104
        %p349 = pneg %p128
        %p350 = pneg %p125
        %p351 = pneg %p149
        %p352 = pneg %p146
        %p353 = pneg %p170
        %p354 = pneg %p167
        %p355 = pneg %p191
        %p356 = pneg %p188
        %p357 = pneg %p212
        %p358 = pneg %p209
        %p359 = pneg %p238
        %p360 = pneg %p235
        %s361 = sand.u32 %s225, 1
        %s362 = scalar_lea.sflag [#allocation5], %s361
        %s363 = sand.u32 %s225, 1
        %s364 = scalar_lea.vmem [#allocation4], %s363
        %p365 = pneg %p266
        %p366 = pneg %p263
        %s367 = smul.u32 8, %s30
        %p368 = scmp.lt.s32.totalorder %s29, 1
        %s369 = scalar_select %p368, %s29, 1
        %p370 = scmp.lt.s32.totalorder %s367, 15
        %s371 = scalar_select %p370, %s367, 15
        %s372 = smul.addr %s369, 16
        %s373 = sadd.s32 %s371, %s372
        %s374 = smul.addr %s373, 8
        %s375 = scalar_lea.vmem %s9, %s374
        %p376 = scmp.lt.s32.totalorder %s29, 1
        %s377 = scalar_select %p376, %s29, 1
        %s378 = smul.addr %s377, 8
        %s379 = scalar_lea.vmem %s0, %s378
        %s380 = smul.u32 8, %s30
        %p381 = scmp.lt.s32.totalorder %s29, 1
        %s382 = scalar_select %p381, %s29, 1
        %p383 = scmp.lt.s32.totalorder %s380, 15
        %s384 = scalar_select %p383, %s380, 15
        %s385 = smul.addr %s382, 16
        %s386 = sadd.s32 %s384, %s385
        %s387 = smul.addr %s386, 8
        %s388 = scalar_lea.vmem %s1, %s387
        %s389 = smul.u32 8, %s30
        %s390 = smul.u32 8, %s30
        %p391 = scmp.lt.s32.totalorder %s29, 1
        %s392 = scalar_select %p391, %s29, 1
        %p393 = scmp.lt.s32.totalorder %s390, 15
        %s394 = scalar_select %p393, %s390, 15
        %s395 = smul.addr %s392, 16
        %s396 = sadd.s32 %s394, %s395
        %s397 = smul.addr %s396, 8
        %s398 = scalar_lea.vmem %s9, %s397
        %s399 = smul.u32 8, %s30
        %p400 = scmp.eq.s32.totalorder %s30, 0
        // Predicated region
        $region53: #{tpu_custom_call.1} parent=51 // pred_check
          %p401 = pneg %p400
        $region54: #{tpu_custom_call.1} parent=51 // pred_check_branch
          %403 = sbr.rel (%p401) target = $region56
        $region55: #{tpu_custom_call.1} parent=51 // pred_region
          %vm404 = vcmask 253952
          %405 = vst.msk [vmem:[#allocation2] sm:$0x1] %vm404, 0.0
        $region56: #{tpu_custom_call.1} parent=51 // pred_fallthru
          _
        %v406 = vld [vmem:[%s388] sm:$0xff]
        %v407 = vld [vmem:[%s388 + $0x8] sm:$0xff]
        %v408 = vld [vmem:[%s388 + $0x10] sm:$0xff]
        %v409 = vld [vmem:[%s388 + $0x18] sm:$0xff]
        %v410 = vld [vmem:[%s388 + $0x20] sm:$0xff]
        %v411 = vld [vmem:[%s388 + $0x28] sm:$0xff]
        %v412 = vld [vmem:[%s388 + $0x30] sm:$0xff]
        %v413 = vld [vmem:[%s388 + $0x38] sm:$0xff]
        %v414 = vld [vmem:[%s4] sm:$0xff]
        %v415 = vld [vmem:[%s4 + $0x8] sm:$0xff]
        %v416 = vld [vmem:[%s4 + $0x10] sm:$0xff]
        %v417 = vld [vmem:[%s4 + $0x18] sm:$0xff]
        %v418 = vld [vmem:[%s6] sm:$0x1]
        %v419 = vperm.slane %v418, 0
        %vm420 = vcmask 261120
        %v422 = vsel %vm420, %v406, 0
        %v425 = vsel %vm420, %v407, 0
        %v428 = vsel %vm420, %v408, 0
        %v431 = vsel %vm420, %v409, 0
        %v434 = vsel %vm420, %v410, 0
        %v437 = vsel %vm420, %v411, 0
        %v440 = vsel %vm420, %v412, 0
        %v443 = vsel %vm420, %v413, 0
        %445 = vmatpush.msra.mxu0 0.0
        %446 = vmatpush.msra.mxu0 0.0
        %447 = vmatpush.msra.mxu0 0.0
        %448 = vmatpush.msra.mxu0 0.0
        %449 = vmatpush.msra.mxu0 0.0
        %450 = vmatpush.msra.mxu0 0.0
        %451 = vmatpush.msra.mxu0 0.0
        %452 = vmatpush.msra.mxu0 0.0
        %453 = vmatpush.msra.mxu0 0.0
        %454 = vmatpush.msra.mxu0 0.0
        %455 = vmatpush.msra.mxu0 0.0
        %456 = vmatpush.msra.mxu0 0.0
        %457 = vmatpush.msra.mxu0 %v417
        %458 = vmatpush.msra.mxu0 %v416
        %459 = vmatpush.msra.mxu0 %v415
        %460 = vmatpush.msra.mxu0 %v414
        %461 = vmatmul.f32.gmra.mxu0 %v422
        %v462 = vpop.f32.mrf.mxu0
        %v463 = vadd.f32 %v419, %v462
        %464 = vmatmul.f32.gmra.mxu0 %v425
        %v465 = vpop.f32.mrf.mxu0
        %v466 = vadd.f32 %v419, %v465
        %467 = vmatmul.f32.gmra.mxu0 %v428
        %v468 = vpop.f32.mrf.mxu0
        %v469 = vadd.f32 %v419, %v468
        %470 = vmatmul.f32.gmra.mxu0 %v431
        %v471 = vpop.f32.mrf.mxu0
        %v472 = vadd.f32 %v419, %v471
        %473 = vmatmul.f32.gmra.mxu0 %v434
        %v474 = vpop.f32.mrf.mxu0
        %v475 = vadd.f32 %v419, %v474
        %476 = vmatmul.f32.gmra.mxu0 %v437
        %v477 = vpop.f32.mrf.mxu0
        %v478 = vadd.f32 %v419, %v477
        %479 = vmatmul.f32.gmra.mxu0 %v440
        %v480 = vpop.f32.mrf.mxu0
        %v481 = vadd.f32 %v419, %v480
        %482 = vmatmul.f32.gmra.mxu0 %v443
        %v483 = vpop.f32.mrf.mxu0
        %v484 = vadd.f32 %v419, %v483
        %485 = vdwg.mxu0
        %v486 = vmax.f32 %v463, 0.0
        %v487 = vmax.f32 %v466, 0.0
        %v488 = vmax.f32 %v469, 0.0
        %v489 = vmax.f32 %v472, 0.0
        %v490 = vmax.f32 %v475, 0.0
        %v491 = vmax.f32 %v478, 0.0
        %v492 = vmax.f32 %v481, 0.0
        %v493 = vmax.f32 %v484, 0.0
        %v494 = vld [vmem:[%s5] sm:$0xff]
        %v495 = vld [vmem:[%s5 + $0x8] sm:$0xff]
        %v496 = vld [vmem:[%s5 + $0x10] sm:$0xff]
        %v497 = vld [vmem:[%s5 + $0x18] sm:$0xff]
        %v498 = vld [vmem:[%s6 + $0x1] sm:$0x1]
        %v499 = vperm.slane %v498, 0
        %v501 = vsel %vm420, %v486, 0
        %v504 = vsel %vm420, %v487, 0
        %v507 = vsel %vm420, %v488, 0
        %v510 = vsel %vm420, %v489, 0
        %v513 = vsel %vm420, %v490, 0
        %v516 = vsel %vm420, %v491, 0
        %v519 = vsel %vm420, %v492, 0
        %v522 = vsel %vm420, %v493, 0
        %524 = vmatpush.msra.mxu0 0.0
        %525 = vmatpush.msra.mxu0 0.0
        %526 = vmatpush.msra.mxu0 0.0
        %527 = vmatpush.msra.mxu0 0.0
        %528 = vmatpush.msra.mxu0 0.0
        %529 = vmatpush.msra.mxu0 0.0
        %530 = vmatpush.msra.mxu0 0.0
        %531 = vmatpush.msra.mxu0 0.0
        %532 = vmatpush.msra.mxu0 0.0
        %533 = vmatpush.msra.mxu0 0.0
        %534 = vmatpush.msra.mxu0 0.0
        %535 = vmatpush.msra.mxu0 0.0
        %536 = vmatpush.msra.mxu0 %v497
        %537 = vmatpush.msra.mxu0 %v496
        %538 = vmatpush.msra.mxu0 %v495
        %539 = vmatpush.msra.mxu0 %v494
        %540 = vmatmul.f32.gmra.mxu0 %v501
        %v541 = vpop.f32.mrf.mxu0
        %v542 = vadd.f32 %v499, %v541
        %543 = vmatmul.f32.gmra.mxu0 %v504
        %v544 = vpop.f32.mrf.mxu0
        %v545 = vadd.f32 %v499, %v544
        %546 = vmatmul.f32.gmra.mxu0 %v507
        %v547 = vpop.f32.mrf.mxu0
        %v548 = vadd.f32 %v499, %v547
        %549 = vmatmul.f32.gmra.mxu0 %v510
        %v550 = vpop.f32.mrf.mxu0
        %v551 = vadd.f32 %v499, %v550
        %552 = vmatmul.f32.gmra.mxu0 %v513
        %v553 = vpop.f32.mrf.mxu0
        %v554 = vadd.f32 %v499, %v553
        %555 = vmatmul.f32.gmra.mxu0 %v516
        %v556 = vpop.f32.mrf.mxu0
        %v557 = vadd.f32 %v499, %v556
        %558 = vmatmul.f32.gmra.mxu0 %v519
        %v559 = vpop.f32.mrf.mxu0
        %v560 = vadd.f32 %v499, %v559
        %561 = vmatmul.f32.gmra.mxu0 %v522
        %v562 = vpop.f32.mrf.mxu0
        %v563 = vadd.f32 %v499, %v562
        %564 = vdwg.mxu0
        %v565 = vxor.u32 %v542, 2147483648
        %v566 = vxor.u32 %v545, 2147483648
        %v567 = vxor.u32 %v548, 2147483648
        %v568 = vxor.u32 %v551, 2147483648
        %v569 = vxor.u32 %v554, 2147483648
        %v570 = vxor.u32 %v557, 2147483648
        %v571 = vxor.u32 %v560, 2147483648
        %v572 = vxor.u32 %v563, 2147483648
        %v573 = vmul.f32 %v565, 1.442695
        %v574 = vpow.pop %v573
        %v575 = vmul.f32 %v566, 1.442695
        %v576 = vpow.pop %v575
        %v577 = vmul.f32 %v567, 1.442695
        %v578 = vpow.pop %v577
        %v579 = vmul.f32 %v568, 1.442695
        %v580 = vpow.pop %v579
        %v581 = vmul.f32 %v569, 1.442695
        %v582 = vpow.pop %v581
        %v583 = vmul.f32 %v570, 1.442695
        %v584 = vpow.pop %v583
        %v585 = vmul.f32 %v571, 1.442695
        %v586 = vpow.pop %v585
        %v587 = vmul.f32 %v572, 1.442695
        %v588 = vpow.pop %v587
        %v589 = vadd.f32 %v574, 1.0
        %v590 = vadd.f32 %v576, 1.0
        %v591 = vadd.f32 %v578, 1.0
        %v592 = vadd.f32 %v580, 1.0
        %v593 = vadd.f32 %v582, 1.0
        %v594 = vadd.f32 %v584, 1.0
        %v595 = vadd.f32 %v586, 1.0
        %v596 = vadd.f32 %v588, 1.0
        %v597 = vrcp.pop %v589
        %v598 = vmul.f32 %v589, %v597
        %v599 = vsub.f32 1.0, %v598
        %v600 = vmul.f32 %v597, %v599
        %v601 = vadd.f32 %v597, %v600
        %vm602 = vweird.f32 %v589
        %vm603 = vweird.f32 %v597
        %vm604 = vmor %vm602, %vm603
        %v605 = vsel %vm604, %v597, %v601
        %v606 = vand.u32 2147483647, %v589
        %vm607 = vcmp.eq.f32.partialorder %v606, 8.507059e+37
        %v608 = vand.u32 %v589, 2147483648
        %v609 = vor.u32 1.1754944e-38, %v608
        %v610 = vsel %vm607, %v609, %v605
        %v611 = vmul.f32 1.0, %v610
        %v612 = vrcp.pop %v590
        %v613 = vmul.f32 %v590, %v612
        %v614 = vsub.f32 1.0, %v613
        %v615 = vmul.f32 %v612, %v614
        %v616 = vadd.f32 %v612, %v615
        %vm617 = vweird.f32 %v590
        %vm618 = vweird.f32 %v612
        %vm619 = vmor %vm617, %vm618
        %v620 = vsel %vm619, %v612, %v616
        %v621 = vand.u32 2147483647, %v590
        %vm622 = vcmp.eq.f32.partialorder %v621, 8.507059e+37
        %v623 = vand.u32 %v590, 2147483648
        %v624 = vor.u32 1.1754944e-38, %v623
        %v625 = vsel %vm622, %v624, %v620
        %v626 = vmul.f32 1.0, %v625
        %v627 = vrcp.pop %v591
        %v628 = vmul.f32 %v591, %v627
        %v629 = vsub.f32 1.0, %v628
        %v630 = vmul.f32 %v627, %v629
        %v631 = vadd.f32 %v627, %v630
        %vm632 = vweird.f32 %v591
        %vm633 = vweird.f32 %v627
        %vm634 = vmor %vm632, %vm633
        %v635 = vsel %vm634, %v627, %v631
        %v636 = vand.u32 2147483647, %v591
        %vm637 = vcmp.eq.f32.partialorder %v636, 8.507059e+37
        %v638 = vand.u32 %v591, 2147483648
        %v639 = vor.u32 1.1754944e-38, %v638
        %v640 = vsel %vm637, %v639, %v635
        %v641 = vmul.f32 1.0, %v640
        %v642 = vrcp.pop %v592
        %v643 = vmul.f32 %v592, %v642
        %v644 = vsub.f32 1.0, %v643
        %v645 = vmul.f32 %v642, %v644
        %v646 = vadd.f32 %v642, %v645
        %vm647 = vweird.f32 %v592
        %vm648 = vweird.f32 %v642
        %vm649 = vmor %vm647, %vm648
        %v650 = vsel %vm649, %v642, %v646
        %v651 = vand.u32 2147483647, %v592
        %vm652 = vcmp.eq.f32.partialorder %v651, 8.507059e+37
        %v653 = vand.u32 %v592, 2147483648
        %v654 = vor.u32 1.1754944e-38, %v653
        %v655 = vsel %vm652, %v654, %v650
        %v656 = vmul.f32 1.0, %v655
        %v657 = vrcp.pop %v593
        %v658 = vmul.f32 %v593, %v657
        %v659 = vsub.f32 1.0, %v658
        %v660 = vmul.f32 %v657, %v659
        %v661 = vadd.f32 %v657, %v660
        %vm662 = vweird.f32 %v593
        %vm663 = vweird.f32 %v657
        %vm664 = vmor %vm662, %vm663
        %v665 = vsel %vm664, %v657, %v661
        %v666 = vand.u32 2147483647, %v593
        %vm667 = vcmp.eq.f32.partialorder %v666, 8.507059e+37
        %v668 = vand.u32 %v593, 2147483648
        %v669 = vor.u32 1.1754944e-38, %v668
        %v670 = vsel %vm667, %v669, %v665
        %v671 = vmul.f32 1.0, %v670
        %v672 = vrcp.pop %v594
        %v673 = vmul.f32 %v594, %v672
        %v674 = vsub.f32 1.0, %v673
        %v675 = vmul.f32 %v672, %v674
        %v676 = vadd.f32 %v672, %v675
        %vm677 = vweird.f32 %v594
        %vm678 = vweird.f32 %v672
        %vm679 = vmor %vm677, %vm678
        %v680 = vsel %vm679, %v672, %v676
        %v681 = vand.u32 2147483647, %v594
        %vm682 = vcmp.eq.f32.partialorder %v681, 8.507059e+37
        %v683 = vand.u32 %v594, 2147483648
        %v684 = vor.u32 1.1754944e-38, %v683
        %v685 = vsel %vm682, %v684, %v680
        %v686 = vmul.f32 1.0, %v685
        %v687 = vrcp.pop %v595
        %v688 = vmul.f32 %v595, %v687
        %v689 = vsub.f32 1.0, %v688
        %v690 = vmul.f32 %v687, %v689
        %v691 = vadd.f32 %v687, %v690
        %vm692 = vweird.f32 %v595
        %vm693 = vweird.f32 %v687
        %vm694 = vmor %vm692, %vm693
        %v695 = vsel %vm694, %v687, %v691
        %v696 = vand.u32 2147483647, %v595
        %vm697 = vcmp.eq.f32.partialorder %v696, 8.507059e+37
        %v698 = vand.u32 %v595, 2147483648
        %v699 = vor.u32 1.1754944e-38, %v698
        %v700 = vsel %vm697, %v699, %v695
        %v701 = vmul.f32 1.0, %v700
        %v702 = vrcp.pop %v596
        %v703 = vmul.f32 %v596, %v702
        %v704 = vsub.f32 1.0, %v703
        %v705 = vmul.f32 %v702, %v704
        %v706 = vadd.f32 %v702, %v705
        %vm707 = vweird.f32 %v596
        %vm708 = vweird.f32 %v702
        %vm709 = vmor %vm707, %vm708
        %v710 = vsel %vm709, %v702, %v706
        %v711 = vand.u32 2147483647, %v596
        %vm712 = vcmp.eq.f32.partialorder %v711, 8.507059e+37
        %v713 = vand.u32 %v596, 2147483648
        %v714 = vor.u32 1.1754944e-38, %v713
        %v715 = vsel %vm712, %v714, %v710
        %v716 = vmul.f32 1.0, %v715
        %717 = vst.msk [vmem:[%s398] sm:$0xff] %vm420, %v611
        %718 = vst.msk [vmem:[%s398 + $0x8] sm:$0xff] %vm420, %v626
        %719 = vst.msk [vmem:[%s398 + $0x10] sm:$0xff] %vm420, %v641
        %720 = vst.msk [vmem:[%s398 + $0x18] sm:$0xff] %vm420, %v656
        %721 = vst.msk [vmem:[%s398 + $0x20] sm:$0xff] %vm420, %v671
        %722 = vst.msk [vmem:[%s398 + $0x28] sm:$0xff] %vm420, %v686
        %723 = vst.msk [vmem:[%s398 + $0x30] sm:$0xff] %vm420, %v701
        %724 = vst.msk [vmem:[%s398 + $0x38] sm:$0xff] %vm420, %v716
        %v725 = vld [vmem:[#allocation2] sm:$0x1]
        %v726 = vsel %vm420, %v406, 0.0
        %v727 = vsel %vm420, %v407, 0.0
        %v728 = vadd.f32 %v726, %v727
        %v729 = vsel %vm420, %v408, 0.0
        %v730 = vadd.f32 %v728, %v729
        %v731 = vsel %vm420, %v409, 0.0
        %v732 = vadd.f32 %v730, %v731
        %v733 = vsel %vm420, %v410, 0.0
        %v734 = vadd.f32 %v732, %v733
        %v735 = vsel %vm420, %v411, 0.0
        %v736 = vadd.f32 %v734, %v735
        %v737 = vsel %vm420, %v412, 0.0
        %v738 = vadd.f32 %v736, %v737
        %v739 = vsel %vm420, %v413, 0.0
        %v740 = vadd.f32 %v738, %v739
        %v741 = vrot.slane %v740, 4
        %v742 = vadd.f32 %v740, %v741
        %v743 = vrot.slane %v742, 2
        %v744 = vadd.f32 %v742, %v743
        %v745 = vrot.slane %v744, 1
        %v746 = vadd.f32 %v744, %v745
        %v747 = vadd.f32 %v725, %v746
        %vm748 = vcmask 253952
        %749 = vst.msk [vmem:[#allocation2] sm:$0x1] %vm748, %v747
        %p750 = scmp.eq.s32.totalorder %s30, 1
        // Predicated region
        $region57: #{tpu_custom_call.1} parent=51 // pred_check
          %p751 = pneg %p750
        $region58: #{tpu_custom_call.1} parent=51 // pred_check_branch
          %753 = sbr.rel (%p751) target = $region60
        $region59: #{tpu_custom_call.1} parent=51 // pred_region
          %v754 = vld [vmem:[%s379] sm:$0xff]
          %v755 = vsel %vm420, %v754, 0.0
          %v756 = vrot.slane %v755, 4
          %v757 = vadd.f32 %v755, %v756
          %v758 = vrot.slane %v757, 2
          %v759 = vadd.f32 %v757, %v758
          %v760 = vrot.slane %v759, 1
          %v761 = vadd.f32 %v759, %v760
          %v762 = vrcp.pop 8.0
          %v763 = vmul.f32 8.0, %v762
          %v764 = vsub.f32 1.0, %v763
          %v765 = vmul.f32 %v762, %v764
          %v766 = vadd.f32 %v762, %v765
          %vm767 = vweird.f32 %v762
          %v768 = vsel %vm767, %v762, %v766
          %v769 = vmul.f32 %v761, %v768
          %v770 = vld [vmem:[#allocation2] sm:$0x1]
          %v771 = vmul.f32 %v770, 0.0078125
          %v773 = vperm.slane %v771, 0
          %774 = vrot.lane.b32.xlu0 %v773, 32
          %v775 = vpop.permute.xlu0 %774
          %v777 = vsel %vm420, %v769, %v775
          %v778 = vld [vmem:[%s2] sm:$0xff]
          %v779 = vld [vmem:[%s2 + $0x8] sm:$0xff]
          %v780 = vld [vmem:[%s2 + $0x10] sm:$0xff]
          %v781 = vld [vmem:[%s2 + $0x18] sm:$0xff]
          %v782 = vld [vmem:[%s2 + $0x20] sm:$0xff]
          %v783 = vld [vmem:[%s2 + $0x28] sm:$0xff]
          %v784 = vld [vmem:[%s2 + $0x30] sm:$0xff]
          %v785 = vld [vmem:[%s2 + $0x38] sm:$0xff]
          %v786 = vld [vmem:[%s3] sm:$0x1]
          %vm787 = vcmask 523264
          %v789 = vsel %vm787, %v777, 0
          %791 = vmatpush.msra.mxu0 0.0
          %792 = vmatpush.msra.mxu0 0.0
          %793 = vmatpush.msra.mxu0 0.0
          %794 = vmatpush.msra.mxu0 0.0
          %795 = vmatpush.msra.mxu0 0.0
          %796 = vmatpush.msra.mxu0 0.0
          %797 = vmatpush.msra.mxu0 0.0
          %798 = vmatpush.msra.mxu0 0.0
          %799 = vmatpush.msra.mxu0 %v785
          %800 = vmatpush.msra.mxu0 %v784
          %801 = vmatpush.msra.mxu0 %v783
          %802 = vmatpush.msra.mxu0 %v782
          %803 = vmatpush.msra.mxu0 %v781
          %804 = vmatpush.msra.mxu0 %v780
          %805 = vmatpush.msra.mxu0 %v779
          %806 = vmatpush.msra.mxu0 %v778
          %807 = vmatmul.f32.gmra.mxu0 %v789
          %v808 = vpop.f32.mrf.mxu0
          %v809 = vadd.f32 %v786, %v808
          %810 = vdwg.mxu0
          %v811 = vmax.f32 %v809, 0.0
          %v812 = vld [vmem:[%s3 + $0x1] sm:$0x1]
          %v813 = vmul.f32 %v811, %v812
          %vm814 = vcmask 1040384
          %v815 = vsel %vm814, %v813, 0.0
          %816 = vadd.xlane.f32.xlu0 %v815
          %v817 = vpop.xlane.xlu0 %816
          %s818 = sld [smem:[#allocation3]]
          %v819 = vstv %s818
          %v820 = vadd.f32 %v817, %v819
          %821 = vst [vmem:[%s364] sm:$0x1] %v820
        $region60: #{tpu_custom_call.1} parent=51 // pred_fallthru
          _
        %s822 = sand.u32 %s225, 1
        %s823 = scalar_lea.sflag [#allocation5], %s822
        %s824 = sand.u32 %s225, 1
        %s825 = scalar_lea.vmem [#allocation4], %s824
        %s826 = smul.u32 8, %s30
        %p827 = scmp.lt.s32.totalorder %s29, 1
        %s828 = scalar_select %p827, %s29, 1
        %p829 = scmp.lt.s32.totalorder %s826, 15
        %s830 = scalar_select %p829, %s826, 15
        %s831 = smul.addr %s828, 16
        %s832 = sadd.s32 %s830, %s831
        %s833 = smul.addr %s832, 8
        %s834 = scalar_lea.vmem %s9, %s833
        // Predicated region
        $region61: #{tpu_custom_call.1} parent=51 // pred_check
          %p835 = pneg %p235
        $region62: #{tpu_custom_call.1} parent=51 // pred_check_branch
          %837 = sbr.rel (%p835) target = $region64
        $region63: #{tpu_custom_call.1} parent=51 // pred_region
          %839 = vsyncadd %s823, 0
          %s840 = scalar_lea.hbm %s8, %s29
          %s842 = sshll.u32 %s825, 4
          %s843 = int_to_ptr.vmem [resolvable:$true] %s842
          %s844 = sshll.u32 %s840, 4
          %s845 = int_to_ptr.hbm [resolvable:$true] %s844
          %847 = dma.vmem_to_hbm [thread:$0]  %s843, 16, %s845, %s823
        $region64: #{tpu_custom_call.1} parent=51 // pred_fallthru
          _
        // Predicated region
        $region65: #{tpu_custom_call.1} parent=51 // pred_check
          %p848 = pneg %p263
        $region66: #{tpu_custom_call.1} parent=51 // pred_check_branch
          %850 = sbr.rel (%p848) target = $region68
        $region67: #{tpu_custom_call.1} parent=51 // pred_region
          %s851 = smul.u32 8, %s30
        $region68: #{tpu_custom_call.1} parent=51 // pred_fallthru
          _
      $region52: #{tpu_custom_call.1} parent=5 // pred_fallthru
        _
      %p852 = scmp.le.s32.totalorder 2, %s20
      // Predicated region
      $region69: #{tpu_custom_call.1} parent=5 // pred_check
        %p853 = pneg %p852
      $region70: #{tpu_custom_call.1} parent=5 // pred_check_branch
        %855 = sbr.rel (%p853) target = $region72
      $region71: #{tpu_custom_call.1} parent=5 // pred_region
        %s856 = ssub.s32 %s20, 2
        // Predicated region
        $region73: #{tpu_custom_call.1} parent=71 // pred_check
          %p857 = pneg %p241
        $region74: #{tpu_custom_call.1} parent=71 // pred_check_branch
          %859 = sbr.rel (%p857) target = $region76
        $region75: #{tpu_custom_call.1} parent=71 // pred_region
          %s860 = sand.u32 %s226, 1
          %s861 = scalar_lea.sflag [#allocation5], %s860
          %s862 = sand.u32 %s226, 1
          %s863 = scalar_lea.vmem [#allocation4], %s862
          %865 = dma.done %s861, 16
        $region76: #{tpu_custom_call.1} parent=71 // pred_fallthru
          _
        // Predicated region
        $region77: #{tpu_custom_call.1} parent=71 // pred_check
          %p866 = pneg %p269
        $region78: #{tpu_custom_call.1} parent=71 // pred_check_branch
          %868 = sbr.rel (%p866) target = $region80
        $region79: #{tpu_custom_call.1} parent=71 // pred_region
          %s869 = smul.u32 8, %s32
          %p870 = scmp.lt.s32.totalorder %s31, 1
          %s871 = scalar_select %p870, %s31, 1
          %p872 = scmp.lt.s32.totalorder %s869, 15
          %s873 = scalar_select %p872, %s869, 15
          %s874 = smul.addr %s871, 16
          %s875 = sadd.s32 %s873, %s874
          %s876 = smul.addr %s875, 8
          %s877 = scalar_lea.vmem %s9, %s876
        $region80: #{tpu_custom_call.1} parent=71 // pred_fallthru
          _
      $region72: #{tpu_custom_call.1} parent=5 // pred_fallthru
        _
    $region6: #{tpu_custom_call.1} parent=1 // loop_footer
      %s24 = sadd.s32 1, %s20
    $region7: #{tpu_custom_call.1} parent=1 // loop_footer_branch
      %19 = sbr.rel target = $region3
    $region8: #{tpu_custom_call.1} parent=1 // loop_exit
      _
    %878 = vsyncpa [#allocation5], 1
    %s879 = scalar_lea.sflag [#allocation5], 1
    %880 = vsyncpa %s879, 1

</llo_original>
